<compile_context>
chip_gen: v5e
topology: v5e:2x2
jax: 0.10.0
libtpu: 0.0.40
codegen_flags: <defaults>
</compile_context>

<pallas_src>
import numpy as np

import jax
import jax.numpy as jnp
from jax.experimental import pallas as pl
from jax.experimental.pallas import tpu as pltpu

INF = 100000000.0
_LANE = 128              # point tiles must be a multiple of the lane width
_MAX_POINT_TILE = 2048


def _round_up(x, m):
    return ((x + m - 1) // m) * m


# --------------------------------------------------------------------------- #
# Pallas kernel: one (image, point-tile) grid cell per invocation
# --------------------------------------------------------------------------- #
def _make_target_kernel(code_size, background_label, attr_bg_label):
    CODE = int(code_size)
    BG = int(background_label)
    ATTR_BG = int(attr_bg_label)
    BIG = float(INF)

    # packed per-GT column layout:
    #   [x1 y1 x2 y2 cx cy depth rest(code-3) label attr valid]
    C_CX, C_CY, C_DEP = 4, 5, 6
    C_LAB = CODE + 4
    C_ATTR = CODE + 5
    C_VALID = CODE + 6

    def kernel(pts_ref, gt_ref, fout_ref, iout_ref):
        # per-point static rows: x, y, rr_lo, rr_hi, stride*radius,
        #                        -alpha/(1.414*sr), 1/stride (or 1.0)
        xs = pts_ref[0:1, :]
        ys = pts_ref[1:2, :]
        rr_lo = pts_ref[2:3, :]
        rr_hi = pts_ref[3:4, :]
        sr = pts_ref[4:5, :]
        neg_scale = pts_ref[5:6, :]
        inv_stride = pts_ref[6:7, :]

        gt = gt_ref[...]                        # (NG_pad, CODE + 7)
        num_g = gt.shape[0]

        cx = gt[:, C_CX:C_CX + 1]               # (NG, 1)
        cy = gt[:, C_CY:C_CY + 1]
        valid = gt[:, C_VALID:C_VALID + 1]

        dx = xs - cx                            # (NG, TP)
        dy = ys - cy
        left = xs - gt[:, 0:1]
        top = ys - gt[:, 1:2]
        right = gt[:, 2:3] - xs
        bottom = gt[:, 3:4] - ys
        max_reg = jnp.maximum(jnp.maximum(left, top), jnp.maximum(right, bottom))

        # center sampling: min(s+dx, s-dx, s+dy, s-dy) > 0 <=> s - max(|dx|,|dy|) > 0
        inside_gt = (sr - jnp.maximum(jnp.abs(dx), jnp.abs(dy))) > 0.0
        inside_rr = (max_reg >= rr_lo) & (max_reg <= rr_hi)
        ok = inside_gt & inside_rr & (valid > 0.5)

        # argmin over squared distance (monotone in sqrt -> same argmin / bg test)
        d2 = jnp.where(ok, dx * dx + dy * dy, BIG)
        min_d2 = jnp.min(d2, axis=0, keepdims=True)                    # (1, TP)
        idx = jax.lax.broadcasted_iota(jnp.int32, d2.shape, 0)
        min_inds = jnp.min(jnp.where(d2 == min_d2, idx, num_g),
                           axis=0, keepdims=True)                      # (1, TP)
        ohf = (idx == min_inds).astype(jnp.float32)                    # one-hot (NG, TP)

        def pick(rows):   # exact one-hot gather (exactly one 1 per lane)
            return jnp.sum(rows * ohf, axis=0, keepdims=True)

        dx_sel = pick(dx)
        dy_sel = pick(dy)
        d2_sel = dx_sel * dx_sel + dy_sel * dy_sel

        is_bg = min_d2 == BIG
        labels = jnp.where(is_bg, BG,
                           pick(gt[:, C_LAB:C_LAB + 1]).astype(jnp.int32))
        attrs = jnp.where(is_bg, ATTR_BG,
                          pick(gt[:, C_ATTR:C_ATTR + 1]).astype(jnp.int32))
        cent = jnp.exp(jnp.sqrt(d2_sel) * neg_scale)

        # fout rows: [centerness, dx/stride, dy/stride, depth, rest...]
        # TODO(synk): a single concatenated slab store would replace ~(code+1)
        # masked row stores by one wide store; row stores kept (known-good
        # lowering) since stores are far from the per-step bottleneck here.
        fout_ref[0:1, :] = cent
        fout_ref[1:2, :] = dx_sel * inv_stride
        fout_ref[2:3, :] = dy_sel * inv_stride
        for c in range(CODE - 2):                       # depth + gt3d[:, 3:]
            fout_ref[3 + c:4 + c, :] = pick(gt[:, C_DEP + c:C_DEP + c + 1])
        iout_ref[0:1, :] = labels
        iout_ref[1:2, :] = attrs

    return kernel


def _fcos3d_targets_pallas(pts_rows, gt_packed, *, code_size, background_label,
                           attr_bg_label, point_tile):
    """pts_rows: (8, P_pad) f32; gt_packed: (B, NG_pad, code+7) f32."""
    B, ng_pad, k_gt = gt_packed.shape
    rows_pt, p_pad = pts_rows.shape
    n_tiles = p_pad // point_tile
    rows_f = 1 + code_size

    kernel = _make_target_kernel(code_size, background_label, attr_bg_label)

    fout, iout = pl.pallas_call(
        kernel,
        out_shape=(
            jax.ShapeDtypeStruct((B, rows_f, p_pad), jnp.float32),   # [cent, bbt...]
            jax.ShapeDtypeStruct((B, 2, p_pad), jnp.int32),          # [labels, attrs]
        ),
        grid=(B, n_tiles),
        in_specs=[
            pl.BlockSpec((rows_pt, point_tile), lambda b, t: (0, t)),
            pl.BlockSpec((None, ng_pad, k_gt), lambda b, t: (b, 0, 0)),
        ],
        out_specs=(
            pl.BlockSpec((None, rows_f, point_tile), lambda b, t: (b, 0, t)),
            pl.BlockSpec((None, 2, point_tile), lambda b, t: (b, 0, t)),
        ),
        compiler_params=pltpu.CompilerParams(
            dimension_semantics=("parallel", "parallel")),
    )(pts_rows, gt_packed)
    return fout, iout


# --------------------------------------------------------------------------- #
# Static per-point data (numpy, built once per featmap configuration)
# --------------------------------------------------------------------------- #
def _build_point_data(featmap_sizes, strides, regress_ranges, radius, alpha,
                      norm_on_bbox):
    xs, ys, rrl, rrh, st = [], [], [], [], []
    num_points = []
    for (h, w), s, rr in zip(featmap_sizes, strides, regress_ranges):
        yy, xx = np.meshgrid(np.arange(h, dtype=np.float32),
                             np.arange(w, dtype=np.float32), indexing="ij")
        xs.append(xx.reshape(-1) * s + s // 2)
        ys.append(yy.reshape(-1) * s + s // 2)
        n = h * w
        num_points.append(n)
        rrl.append(np.full((n,), float(rr[0]), np.float32))
        rrh.append(np.full((n,), float(rr[1]), np.float32))
        st.append(np.full((n,), float(s), np.float32))
    x = np.concatenate(xs).astype(np.float32)
    y = np.concatenate(ys).astype(np.float32)
    stride = np.concatenate(st)
    sr = (stride * float(radius)).astype(np.float32)
    neg_scale = (-float(alpha) / (1.414 * sr)).astype(np.float32)
    inv_stride = ((1.0 / stride) if norm_on_bbox
                  else np.ones_like(stride)).astype(np.float32)
    return dict(x=x, y=y, rr_lo=np.concatenate(rrl), rr_hi=np.concatenate(rrh),
                stride=stride, sr=sr, neg_scale=neg_scale, inv_stride=inv_stride,
                num_points=num_points)


# --------------------------------------------------------------------------- #
# Pure-JAX reference (torch-faithful) for verification
# --------------------------------------------------------------------------- #
def _ref_single_image(points, rr, sr, inv_stride, gtb, c2d, dep, gt3d, lab3d, attr,
                      *, alpha, bg_label, attr_bg_label, code_size):
    P = points.shape[0]
    ng = gtb.shape[0]
    if ng == 0:
        return (jnp.full((P,), bg_label, jnp.int32),
                jnp.zeros((P, code_size), jnp.float32),
                jnp.zeros((P,), jnp.float32),
                jnp.full((P,), attr_bg_label, jnp.int32))
    gt3d = gt3d.at[:, 6].set(-jnp.arctan2(gt3d[:, 0], gt3d[:, 2]) + gt3d[:, 6])
    xs = points[:, 0:1]
    ys = points[:, 1:2]
    dx = xs - c2d[None, :, 0]
    dy = ys - c2d[None, :, 1]
    left = xs - gtb[None, :, 0]
    top = ys - gtb[None, :, 1]
    right = gtb[None, :, 2] - xs
    bottom = gtb[None, :, 3] - ys
    max_reg = jnp.maximum(jnp.maximum(left, top), jnp.maximum(right, bottom))
    sr_ = sr[:, None]
    inside_gt = (sr_ - jnp.maximum(jnp.abs(dx), jnp.abs(dy))) > 0
    inside_rr = (max_reg >= rr[:, 0:1]) & (max_reg <= rr[:, 1:2])
    dists = jnp.sqrt(dx * dx + dy * dy)
    dists = jnp.where(inside_gt, dists, INF)
    dists = jnp.where(inside_rr, dists, INF)
    min_dist = dists.min(1)
    inds = dists.argmin(1)
    labels_3d = jnp.where(min_dist == INF, bg_label, lab3d[inds]).astype(jnp.int32)
    attr_t = jnp.where(min_dist == INF, attr_bg_label, attr[inds]).astype(jnp.int32)
    pidx = jnp.arange(P)
    dx_s = dx[pidx, inds]
    dy_s = dy[pidx, inds]
    bbt = jnp.concatenate([dx_s[:, None], dy_s[:, None],
                           dep[inds][:, None], gt3d[inds, 3:]], -1)
    rel = jnp.sqrt(dx_s * dx_s + dy_s * dy_s) / (1.414 * sr)
    cent = jnp.exp(-alpha * rel)
    bbt = bbt.at[:, :2].multiply(inv_stride[:, None])
    return labels_3d, bbt, cent, attr_t


# --------------------------------------------------------------------------- #
# Module
# --------------------------------------------------------------------------- #
class FCOS3DTargetPallas:
    def __init__(self, num_classes, background_label, bbox_code_size,
                 regress_ranges, strides, pred_attrs, num_attrs,
                 center_sampling=True, center_sample_radius=1.5,
                 centerness_alpha=2.5, norm_on_bbox=True,
                 use_pallas=True, max_point_tile=_MAX_POINT_TILE):
        self.background_label = (num_classes if background_label is None
                                 else background_label)
        self.bbox_code_size = bbox_code_size
        self.regress_ranges = regress_ranges
        self.strides = strides
        self.attr_background_label = num_attrs if pred_attrs else -1
        self.center_sampling = center_sampling
        self.center_sample_radius = center_sample_radius
        self.centerness_alpha = centerness_alpha
        self.norm_on_bbox = norm_on_bbox
        self.use_pallas = use_pallas
        self.max_point_tile = max_point_tile
        self._point_cache = {}
        assert self.center_sampling is True

    def _point_rows(self, featmap_sizes):
        key = tuple(featmap_sizes)
        if key in self._point_cache:
            return self._point_cache[key]
        pd = _build_point_data(featmap_sizes, self.strides, self.regress_ranges,
                               self.center_sample_radius, self.centerness_alpha,
                               self.norm_on_bbox)
        P = int(pd["x"].shape[0])
        tp = min(self.max_point_tile, _round_up(max(P, _LANE), _LANE))
        p_pad = _round_up(P, tp)
        rows = np.ones((8, p_pad), np.float32)   # padded points get benign values
        rows[5, :] = -1.0                        # keep padded centerness finite
        rows[0, :P] = pd["x"]
        rows[1, :P] = pd["y"]
        rows[2, :P] = pd["rr_lo"]
        rows[3, :P] = pd["rr_hi"]
        rows[4, :P] = pd["sr"]
        rows[5, :P] = pd["neg_scale"]
        rows[6, :P] = pd["inv_stride"]
        entry = (pd, jnp.asarray(rows), tp, p_pad)
        self._point_cache[key] = entry
        return entry

    def __call__(self, cls_scores, bbox_preds, gt_bboxes_list, gt_labels_list,
                 gt_bboxes_3d_list, gt_labels_3d_list, centers2d_list,
                 depths_list, attr_labels_list):
        featmap_sizes = [tuple(int(d) for d in f.shape[-2:]) for f in cls_scores]
        assert len(featmap_sizes) == len(self.regress_ranges)
        pd, pts_rows, tp, p_pad = self._point_rows(featmap_sizes)
        num_points = pd["num_points"]
        P = int(pd["x"].shape[0])
        B = len(gt_bboxes_list)
        code = self.bbox_code_size

        if attr_labels_list is None:
            attr_labels_list = [
                jnp.full(jnp.asarray(lab).shape, self.attr_background_label,
                         jnp.int32) for lab in gt_labels_list]
        num_gts = [int(jnp.asarray(lab).shape[0]) for lab in gt_labels_list]

        if self.use_pallas:
            ng_pad = _round_up(max(max(num_gts), 1), 8)
            k_gt = code + 7
            packed = []
            for b in range(B):
                ng = num_gts[b]
                if ng == 0:
                    packed.append(jnp.zeros((ng_pad, k_gt), jnp.float32))
                    continue
                gtb = jnp.asarray(gt_bboxes_list[b], jnp.float32)
                c2d = jnp.asarray(centers2d_list[b], jnp.float32)
                dep = jnp.asarray(depths_list[b], jnp.float32).reshape(ng, 1)
                gt3d = jnp.asarray(gt_bboxes_3d_list[b], jnp.float32)
                lab3d = jnp.asarray(gt_labels_3d_list[b]).astype(jnp.float32)
                attr = jnp.asarray(attr_labels_list[b]).astype(jnp.float32)
                # yaw pre-adjustment: yaw <- -atan2(x, z) + yaw
                gt3d = gt3d.at[:, 6].set(
                    -jnp.arctan2(gt3d[:, 0], gt3d[:, 2]) + gt3d[:, 6])
                img = jnp.concatenate(
                    [gtb, c2d, dep, gt3d[:, 3:], lab3d.reshape(ng, 1),
                     attr.reshape(ng, 1), jnp.ones((ng, 1), jnp.float32)],
                    axis=1)                                     # (ng, code + 7)
                packed.append(jnp.pad(img, ((0, ng_pad - ng), (0, 0))))
            gt_packed = jnp.stack(packed, axis=0)               # (B, ng_pad, code+7)

            fout, iout = _fcos3d_targets_pallas(
                pts_rows, gt_packed, code_size=code,
                background_label=self.background_label,
                attr_bg_label=self.attr_background_label,
                point_tile=tp)

            per_img = []
            for b in range(B):
                if num_gts[b] == 0:
                    # reference early-return: all background / zero targets
                    per_img.append((
                        jnp.full((P,), self.background_label, jnp.int32),
                        jnp.zeros((P, code), jnp.float32),
                        jnp.zeros((P,), jnp.float32),
                        jnp.full((P,), self.attr_background_label, jnp.int32)))
                else:
                    per_img.append((iout[b, 0, :P],
                                    fout[b, 1:, :P].T,
                                    fout[b, 0, :P],
                                    iout[b, 1, :P]))
        else:
            points = jnp.asarray(np.stack([pd["x"], pd["y"]], axis=1))
            rr = jnp.asarray(np.stack([pd["rr_lo"], pd["rr_hi"]], axis=1))
            sr = jnp.asarray(pd["sr"])
            inv_stride = jnp.asarray(pd["inv_stride"])
            per_img = []
            for b in range(B):
                per_img.append(_ref_single_image(
                    points, rr, sr, inv_stride,
                    jnp.asarray(gt_bboxes_list[b], jnp.float32),
                    jnp.asarray(centers2d_list[b], jnp.float32),
                    jnp.asarray(depths_list[b], jnp.float32),
                    jnp.asarray(gt_bboxes_3d_list[b], jnp.float32),
                    jnp.asarray(gt_labels_3d_list[b], jnp.int32),
                    jnp.asarray(attr_labels_list[b], jnp.int32),
                    alpha=self.centerness_alpha,
                    bg_label=self.background_label,
                    attr_bg_label=self.attr_background_label,
                    code_size=code))

        # split per level, concat over images (stride normalization already
        # folded into dx/dy via inv_stride).
        starts = np.concatenate([[0], np.cumsum(num_points)])
        out_labels, out_bbt, out_cent, out_attr = [], [], [], []
        for i in range(len(num_points)):
            s, e = int(starts[i]), int(starts[i + 1])
            out_labels.append(jnp.concatenate([p[0][s:e] for p in per_img]))
            out_bbt.append(jnp.concatenate([p[1][s:e] for p in per_img]))
            out_cent.append(jnp.concatenate([p[2][s:e] for p in per_img]))
            out_attr.append(jnp.concatenate([p[3][s:e] for p in per_img]))
        return out_labels, out_bbt, out_cent, out_attr


# --------------------------------------------------------------------------- #
# Main
# --------------------------------------------------------------------------- #
if __name__ == "__main__":
    key = jax.random.PRNGKey(0)
    num_classes = 10
    bbox_code_size = 9
    num_attrs = 9
    strides = (8, 16)
    regress_ranges = ((-1, 48), (48, INF))
    B = 3
    featmaps = [(16, 16), (8, 8)]
    img_size = 128.0
    gt_counts = [5, 3, 0]          # last image exercises the num_gts == 0 path

    # NCHW feature maps (only shapes/dtype matter, as in the torch module)
    cls_scores = [jnp.zeros((B, num_classes, h, w), jnp.float32) for h, w in featmaps]
    bbox_preds = [jnp.zeros((B, bbox_code_size, h, w), jnp.float32) for h, w in featmaps]

    gt_bboxes_list, gt_labels_list = [], []
    gt_bboxes_3d_list, gt_labels_3d_list = [], []
    centers2d_list, depths_list, attr_labels_list = [], [], []
    for b in range(B):
        ng = gt_counts[b]
        key, k1, k2, k3, k4, k5, k6, k7 = jax.random.split(key, 8)
        xy1 = jax.random.uniform(k1, (ng, 2), minval=0.0, maxval=img_size * 0.6)
        wh = jax.random.uniform(k2, (ng, 2), minval=8.0, maxval=48.0)
        gtb = jnp.concatenate([xy1, xy1 + wh], -1)
        gt_bboxes_list.append(gtb)
        gt_labels_list.append(jax.random.randint(k3, (ng,), 0, num_classes))
        gt3d = jax.random.normal(k4, (ng, bbox_code_size), jnp.float32)
        gt3d = gt3d.at[:, 2].set(jnp.abs(gt3d[:, 2]) + 1.0)     # positive z
        gt_bboxes_3d_list.append(gt3d)
        gt_labels_3d_list.append(jax.random.randint(k5, (ng,), 0, num_classes))
        centers2d_list.append((gtb[:, :2] + gtb[:, 2:]) / 2.0)
        depths_list.append(jax.random.uniform(k6, (ng,), minval=1.0, maxval=60.0))
        attr_labels_list.append(jax.random.randint(k7, (ng,), 0, num_attrs))

    common = dict(num_classes=num_classes, background_label=None,
                  bbox_code_size=bbox_code_size, regress_ranges=regress_ranges,
                  strides=strides, pred_attrs=True, num_attrs=num_attrs,
                  center_sampling=True, center_sample_radius=1.5,
                  centerness_alpha=2.5, norm_on_bbox=True)

    target_pallas = FCOS3DTargetPallas(use_pallas=True, **common)
    target_ref = FCOS3DTargetPallas(use_pallas=False, **common)

    args = (cls_scores, bbox_preds, gt_bboxes_list, gt_labels_list,
            gt_bboxes_3d_list, gt_labels_3d_list, centers2d_list,
            depths_list, attr_labels_list)

    outs = target_pallas(*args)
    jax.block_until_ready(outs)

    refs = target_ref(*args)
    jax.block_until_ready(refs)

    labels_p, bbt_p, cent_p, attr_p = outs
    labels_r, bbt_r, cent_r, attr_r = refs
    for i in range(len(labels_p)):
        assert np.array_equal(np.asarray(labels_p[i]), np.asarray(labels_r[i]))
        assert np.array_equal(np.asarray(attr_p[i]), np.asarray(attr_r[i]))
        assert np.allclose(np.asarray(cent_p[i]), np.asarray(cent_r[i]),
                           rtol=1e-4, atol=1e-4)
        assert np.allclose(np.asarray(bbt_p[i]), np.asarray(bbt_r[i]),
                           rtol=1e-4, atol=1e-4)

    print("KERNEL_OK")
</pallas_src>

<mosaic_0001>
module attributes {stable_mosaic.version = 11 : i64} {
  func.func @kernel(%arg0: i32, %arg1: i32, %arg2: memref<8x384xf32, #tpu.memory_space<vmem>>, %arg3: memref<1x8x16xf32, #tpu.memory_space<vmem>>, %arg4: memref<1x10x384xf32, #tpu.memory_space<vmem>>, %arg5: memref<1x2x384xi32, #tpu.memory_space<vmem>>) attributes {dimension_semantics = [#tpu.dimension_semantics<parallel>, #tpu.dimension_semantics<parallel>], iteration_bounds = array<i64: 3, 1>, scalar_prefetch = 0 : i64, scratch_operands = 0 : i64, tpu.core_type = #tpu.core_type<tc>, window_params = [{transform_indices = @transform_0, window_bounds = array<i64: 8, 384>}, {transform_indices = @transform_1, window_bounds = array<i64: 1, 8, 16>}, {transform_indices = @transform_2, window_bounds = array<i64: 1, 10, 384>}, {transform_indices = @transform_3, window_bounds = array<i64: 1, 2, 384>}]} {
    %c0 = arith.constant 0 : index
    %c0_0 = arith.constant 0 : index
    %0 = vector.load %arg2[%c0, %c0_0] : memref<8x384xf32, #tpu.memory_space<vmem>>, vector<1x384xf32>
    %c1 = arith.constant 1 : index
    %c0_1 = arith.constant 0 : index
    %1 = vector.load %arg2[%c1, %c0_1] : memref<8x384xf32, #tpu.memory_space<vmem>>, vector<1x384xf32>
    %c2 = arith.constant 2 : index
    %c0_2 = arith.constant 0 : index
    %2 = vector.load %arg2[%c2, %c0_2] : memref<8x384xf32, #tpu.memory_space<vmem>>, vector<1x384xf32>
    %c3 = arith.constant 3 : index
    %c0_3 = arith.constant 0 : index
    %3 = vector.load %arg2[%c3, %c0_3] : memref<8x384xf32, #tpu.memory_space<vmem>>, vector<1x384xf32>
    %c4 = arith.constant 4 : index
    %c0_4 = arith.constant 0 : index
    %4 = vector.load %arg2[%c4, %c0_4] : memref<8x384xf32, #tpu.memory_space<vmem>>, vector<1x384xf32>
    %c5 = arith.constant 5 : index
    %c0_5 = arith.constant 0 : index
    %5 = vector.load %arg2[%c5, %c0_5] : memref<8x384xf32, #tpu.memory_space<vmem>>, vector<1x384xf32>
    %c6 = arith.constant 6 : index
    %c0_6 = arith.constant 0 : index
    %6 = vector.load %arg2[%c6, %c0_6] : memref<8x384xf32, #tpu.memory_space<vmem>>, vector<1x384xf32>
    %c0_7 = arith.constant 0 : index
    %c0_8 = arith.constant 0 : index
    %c0_9 = arith.constant 0 : index
    %7 = vector.load %arg3[%c0_7, %c0_8, %c0_9] : memref<1x8x16xf32, #tpu.memory_space<vmem>>, vector<1x8x16xf32>
    %8 = vector.shape_cast %7 : vector<1x8x16xf32> to vector<8x16xf32>
    %9 = vector.extract_strided_slice %8 {offsets = [0, 4], sizes = [8, 1], strides = [1, 1]} : vector<8x16xf32> to vector<8x1xf32>
    %10 = vector.extract_strided_slice %8 {offsets = [0, 5], sizes = [8, 1], strides = [1, 1]} : vector<8x16xf32> to vector<8x1xf32>
    %11 = vector.extract_strided_slice %8 {offsets = [0, 15], sizes = [8, 1], strides = [1, 1]} : vector<8x16xf32> to vector<8x1xf32>
    %12 = vector.broadcast %0 : vector<1x384xf32> to vector<8x384xf32>
    %13 = vector.broadcast %9 : vector<8x1xf32> to vector<8x384xf32>
    %14 = arith.subf %12, %13 : vector<8x384xf32>
    %15 = vector.broadcast %1 : vector<1x384xf32> to vector<8x384xf32>
    %16 = vector.broadcast %10 : vector<8x1xf32> to vector<8x384xf32>
    %17 = arith.subf %15, %16 : vector<8x384xf32>
    %18 = vector.extract_strided_slice %8 {offsets = [0, 0], sizes = [8, 1], strides = [1, 1]} : vector<8x16xf32> to vector<8x1xf32>
    %19 = vector.broadcast %0 : vector<1x384xf32> to vector<8x384xf32>
    %20 = vector.broadcast %18 : vector<8x1xf32> to vector<8x384xf32>
    %21 = arith.subf %19, %20 : vector<8x384xf32>
    %22 = vector.extract_strided_slice %8 {offsets = [0, 1], sizes = [8, 1], strides = [1, 1]} : vector<8x16xf32> to vector<8x1xf32>
    %23 = vector.broadcast %1 : vector<1x384xf32> to vector<8x384xf32>
    %24 = vector.broadcast %22 : vector<8x1xf32> to vector<8x384xf32>
    %25 = arith.subf %23, %24 : vector<8x384xf32>
    %26 = vector.extract_strided_slice %8 {offsets = [0, 2], sizes = [8, 1], strides = [1, 1]} : vector<8x16xf32> to vector<8x1xf32>
    %27 = vector.broadcast %26 : vector<8x1xf32> to vector<8x384xf32>
    %28 = vector.broadcast %0 : vector<1x384xf32> to vector<8x384xf32>
    %29 = arith.subf %27, %28 : vector<8x384xf32>
    %30 = vector.extract_strided_slice %8 {offsets = [0, 3], sizes = [8, 1], strides = [1, 1]} : vector<8x16xf32> to vector<8x1xf32>
    %31 = vector.broadcast %30 : vector<8x1xf32> to vector<8x384xf32>
    %32 = vector.broadcast %1 : vector<1x384xf32> to vector<8x384xf32>
    %33 = arith.subf %31, %32 : vector<8x384xf32>
    %34 = arith.maximumf %21, %25 : vector<8x384xf32>
    %35 = arith.maximumf %29, %33 : vector<8x384xf32>
    %36 = arith.maximumf %34, %35 : vector<8x384xf32>
    %37 = math.absf %14 : vector<8x384xf32>
    %38 = math.absf %17 : vector<8x384xf32>
    %39 = arith.maximumf %37, %38 : vector<8x384xf32>
    %40 = vector.broadcast %4 : vector<1x384xf32> to vector<8x384xf32>
    %41 = arith.subf %40, %39 : vector<8x384xf32>
    %cst = arith.constant 0.000000e+00 : f32
    %42 = vector.broadcast %cst : f32 to vector<8x384xf32>
    %43 = arith.cmpf ogt, %41, %42 : vector<8x384xf32>
    %44 = vector.broadcast %2 : vector<1x384xf32> to vector<8x384xf32>
    %45 = arith.cmpf oge, %36, %44 : vector<8x384xf32>
    %46 = vector.broadcast %3 : vector<1x384xf32> to vector<8x384xf32>
    %47 = arith.cmpf ole, %36, %46 : vector<8x384xf32>
    %48 = arith.andi %45, %47 : vector<8x384xi1>
    %49 = arith.andi %43, %48 : vector<8x384xi1>
    %cst_10 = arith.constant 5.000000e-01 : f32
    %50 = vector.broadcast %cst_10 : f32 to vector<8x1xf32>
    %51 = arith.cmpf ogt, %11, %50 : vector<8x1xf32>
    %52 = vector.broadcast %51 : vector<8x1xi1> to vector<8x384xi1>
    %53 = arith.andi %49, %52 : vector<8x384xi1>
    %54 = arith.mulf %14, %14 : vector<8x384xf32>
    %55 = arith.mulf %17, %17 : vector<8x384xf32>
    %56 = arith.addf %54, %55 : vector<8x384xf32>
    %cst_11 = arith.constant 1.000000e+08 : f32
    %57 = vector.broadcast %cst_11 : f32 to vector<8x384xf32>
    %58 = arith.select %53, %56, %57 : vector<8x384xi1>, vector<8x384xf32>
    %cst_12 = arith.constant dense<0x7F800000> : vector<384xf32>
    %59 = vector.multi_reduction <minimumf>, %58, %cst_12 [0] : vector<8x384xf32> to vector<384xf32>
    %60 = vector.shape_cast %59 : vector<384xf32> to vector<1x384xf32>
    %61 = tpu.iota {dimensions = array<i32: 0>} : vector<8x384xi32>
    %62 = vector.broadcast %60 : vector<1x384xf32> to vector<8x384xf32>
    %63 = arith.cmpf oeq, %58, %62 : vector<8x384xf32>
    %c8_i32 = arith.constant 8 : i32
    %64 = vector.broadcast %c8_i32 : i32 to vector<8x384xi32>
    %65 = arith.select %63, %61, %64 : vector<8x384xi1>, vector<8x384xi32>
    %cst_13 = arith.constant dense<2147483647> : vector<384xi32>
    %66 = vector.multi_reduction <minsi>, %65, %cst_13 [0] : vector<8x384xi32> to vector<384xi32>
    %67 = vector.shape_cast %66 : vector<384xi32> to vector<1x384xi32>
    %68 = vector.broadcast %67 : vector<1x384xi32> to vector<8x384xi32>
    %69 = arith.cmpi eq, %61, %68 : vector<8x384xi32>
    %70 = arith.extui %69 : vector<8x384xi1> to vector<8x384xi32>
    %71 = arith.sitofp %70 : vector<8x384xi32> to vector<8x384xf32>
    %72 = arith.mulf %14, %71 : vector<8x384xf32>
    %cst_14 = arith.constant dense<0.000000e+00> : vector<384xf32>
    %73 = vector.multi_reduction <add>, %72, %cst_14 [0] : vector<8x384xf32> to vector<384xf32>
    %74 = vector.shape_cast %73 : vector<384xf32> to vector<1x384xf32>
    %75 = arith.mulf %17, %71 : vector<8x384xf32>
    %cst_15 = arith.constant dense<0.000000e+00> : vector<384xf32>
    %76 = vector.multi_reduction <add>, %75, %cst_15 [0] : vector<8x384xf32> to vector<384xf32>
    %77 = vector.shape_cast %76 : vector<384xf32> to vector<1x384xf32>
    %78 = arith.mulf %74, %74 : vector<1x384xf32>
    %79 = arith.mulf %77, %77 : vector<1x384xf32>
    %80 = arith.addf %78, %79 : vector<1x384xf32>
    %cst_16 = arith.constant 1.000000e+08 : f32
    %81 = vector.broadcast %cst_16 : f32 to vector<1x384xf32>
    %82 = arith.cmpf oeq, %60, %81 : vector<1x384xf32>
    %83 = vector.extract_strided_slice %8 {offsets = [0, 13], sizes = [8, 1], strides = [1, 1]} : vector<8x16xf32> to vector<8x1xf32>
    %84 = vector.broadcast %83 : vector<8x1xf32> to vector<8x384xf32>
    %85 = arith.mulf %84, %71 : vector<8x384xf32>
    %cst_17 = arith.constant dense<0.000000e+00> : vector<384xf32>
    %86 = vector.multi_reduction <add>, %85, %cst_17 [0] : vector<8x384xf32> to vector<384xf32>
    %87 = vector.shape_cast %86 : vector<384xf32> to vector<1x384xf32>
    %88 = arith.fptosi %87 : vector<1x384xf32> to vector<1x384xi32>
    %c10_i32 = arith.constant 10 : i32
    %89 = vector.broadcast %c10_i32 : i32 to vector<1x384xi32>
    %90 = arith.select %82, %89, %88 : vector<1x384xi1>, vector<1x384xi32>
    %91 = vector.extract_strided_slice %8 {offsets = [0, 14], sizes = [8, 1], strides = [1, 1]} : vector<8x16xf32> to vector<8x1xf32>
    %92 = vector.broadcast %91 : vector<8x1xf32> to vector<8x384xf32>
    %93 = arith.mulf %92, %71 : vector<8x384xf32>
    %cst_18 = arith.constant dense<0.000000e+00> : vector<384xf32>
    %94 = vector.multi_reduction <add>, %93, %cst_18 [0] : vector<8x384xf32> to vector<384xf32>
    %95 = vector.shape_cast %94 : vector<384xf32> to vector<1x384xf32>
    %96 = arith.fptosi %95 : vector<1x384xf32> to vector<1x384xi32>
    %c9_i32 = arith.constant 9 : i32
    %97 = vector.broadcast %c9_i32 : i32 to vector<1x384xi32>
    %98 = arith.select %82, %97, %96 : vector<1x384xi1>, vector<1x384xi32>
    %99 = math.sqrt %80 : vector<1x384xf32>
    %100 = arith.mulf %99, %5 : vector<1x384xf32>
    %101 = math.exp %100 : vector<1x384xf32>
    %c0_19 = arith.constant 0 : index
    %c0_20 = arith.constant 0 : index
    %c0_21 = arith.constant 0 : index
    %102 = vector.load %arg4[%c0_19, %c0_20, %c0_21] : memref<1x10x384xf32, #tpu.memory_space<vmem>>, vector<1x1x384xf32>
    %103 = vector.shape_cast %102 : vector<1x1x384xf32> to vector<1x384xf32>
    %104 = vector.shape_cast %101 : vector<1x384xf32> to vector<1x1x384xf32>
    tpu.vector_store %arg4[%c0_19, %c0_20, %c0_21], %104 {strides = array<i32>} : memref<1x10x384xf32, #tpu.memory_space<vmem>>, vector<1x1x384xf32>,
    %105 = arith.mulf %74, %6 : vector<1x384xf32>
    %c0_22 = arith.constant 0 : index
    %c1_23 = arith.constant 1 : index
    %c0_24 = arith.constant 0 : index
    %106 = vector.load %arg4[%c0_22, %c1_23, %c0_24] : memref<1x10x384xf32, #tpu.memory_space<vmem>>, vector<1x1x384xf32>
    %107 = vector.shape_cast %106 : vector<1x1x384xf32> to vector<1x384xf32>
    %108 = vector.shape_cast %105 : vector<1x384xf32> to vector<1x1x384xf32>
    tpu.vector_store %arg4[%c0_22, %c1_23, %c0_24], %108 {strides = array<i32>} : memref<1x10x384xf32, #tpu.memory_space<vmem>>, vector<1x1x384xf32>,
    %109 = arith.mulf %77, %6 : vector<1x384xf32>
    %c0_25 = arith.constant 0 : index
    %c2_26 = arith.constant 2 : index
    %c0_27 = arith.constant 0 : index
    %110 = vector.load %arg4[%c0_25, %c2_26, %c0_27] : memref<1x10x384xf32, #tpu.memory_space<vmem>>, vector<1x1x384xf32>
    %111 = vector.shape_cast %110 : vector<1x1x384xf32> to vector<1x384xf32>
    %112 = vector.shape_cast %109 : vector<1x384xf32> to vector<1x1x384xf32>
    tpu.vector_store %arg4[%c0_25, %c2_26, %c0_27], %112 {strides = array<i32>} : memref<1x10x384xf32, #tpu.memory_space<vmem>>, vector<1x1x384xf32>,
    %113 = vector.extract_strided_slice %8 {offsets = [0, 6], sizes = [8, 1], strides = [1, 1]} : vector<8x16xf32> to vector<8x1xf32>
    %114 = vector.broadcast %113 : vector<8x1xf32> to vector<8x384xf32>
    %115 = arith.mulf %114, %71 : vector<8x384xf32>
    %cst_28 = arith.constant dense<0.000000e+00> : vector<384xf32>
    %116 = vector.multi_reduction <add>, %115, %cst_28 [0] : vector<8x384xf32> to vector<384xf32>
    %117 = vector.shape_cast %116 : vector<384xf32> to vector<1x384xf32>
    %c0_29 = arith.constant 0 : index
    %c3_30 = arith.constant 3 : index
    %c0_31 = arith.constant 0 : index
    %118 = vector.load %arg4[%c0_29, %c3_30, %c0_31] : memref<1x10x384xf32, #tpu.memory_space<vmem>>, vector<1x1x384xf32>
    %119 = vector.shape_cast %118 : vector<1x1x384xf32> to vector<1x384xf32>
    %120 = vector.shape_cast %117 : vector<1x384xf32> to vector<1x1x384xf32>
    tpu.vector_store %arg4[%c0_29, %c3_30, %c0_31], %120 {strides = array<i32>} : memref<1x10x384xf32, #tpu.memory_space<vmem>>, vector<1x1x384xf32>,
    %121 = vector.extract_strided_slice %8 {offsets = [0, 7], sizes = [8, 1], strides = [1, 1]} : vector<8x16xf32> to vector<8x1xf32>
    %122 = vector.broadcast %121 : vector<8x1xf32> to vector<8x384xf32>
    %123 = arith.mulf %122, %71 : vector<8x384xf32>
    %cst_32 = arith.constant dense<0.000000e+00> : vector<384xf32>
    %124 = vector.multi_reduction <add>, %123, %cst_32 [0] : vector<8x384xf32> to vector<384xf32>
    %125 = vector.shape_cast %124 : vector<384xf32> to vector<1x384xf32>
    %c0_33 = arith.constant 0 : index
    %c4_34 = arith.constant 4 : index
    %c0_35 = arith.constant 0 : index
    %126 = vector.load %arg4[%c0_33, %c4_34, %c0_35] : memref<1x10x384xf32, #tpu.memory_space<vmem>>, vector<1x1x384xf32>
    %127 = vector.shape_cast %126 : vector<1x1x384xf32> to vector<1x384xf32>
    %128 = vector.shape_cast %125 : vector<1x384xf32> to vector<1x1x384xf32>
    tpu.vector_store %arg4[%c0_33, %c4_34, %c0_35], %128 {strides = array<i32>} : memref<1x10x384xf32, #tpu.memory_space<vmem>>, vector<1x1x384xf32>,
    %129 = vector.extract_strided_slice %8 {offsets = [0, 8], sizes = [8, 1], strides = [1, 1]} : vector<8x16xf32> to vector<8x1xf32>
    %130 = vector.broadcast %129 : vector<8x1xf32> to vector<8x384xf32>
    %131 = arith.mulf %130, %71 : vector<8x384xf32>
    %cst_36 = arith.constant dense<0.000000e+00> : vector<384xf32>
    %132 = vector.multi_reduction <add>, %131, %cst_36 [0] : vector<8x384xf32> to vector<384xf32>
    %133 = vector.shape_cast %132 : vector<384xf32> to vector<1x384xf32>
    %c0_37 = arith.constant 0 : index
    %c5_38 = arith.constant 5 : index
    %c0_39 = arith.constant 0 : index
    %134 = vector.load %arg4[%c0_37, %c5_38, %c0_39] : memref<1x10x384xf32, #tpu.memory_space<vmem>>, vector<1x1x384xf32>
    %135 = vector.shape_cast %134 : vector<1x1x384xf32> to vector<1x384xf32>
    %136 = vector.shape_cast %133 : vector<1x384xf32> to vector<1x1x384xf32>
    tpu.vector_store %arg4[%c0_37, %c5_38, %c0_39], %136 {strides = array<i32>} : memref<1x10x384xf32, #tpu.memory_space<vmem>>, vector<1x1x384xf32>,
    %137 = vector.extract_strided_slice %8 {offsets = [0, 9], sizes = [8, 1], strides = [1, 1]} : vector<8x16xf32> to vector<8x1xf32>
    %138 = vector.broadcast %137 : vector<8x1xf32> to vector<8x384xf32>
    %139 = arith.mulf %138, %71 : vector<8x384xf32>
    %cst_40 = arith.constant dense<0.000000e+00> : vector<384xf32>
    %140 = vector.multi_reduction <add>, %139, %cst_40 [0] : vector<8x384xf32> to vector<384xf32>
    %141 = vector.shape_cast %140 : vector<384xf32> to vector<1x384xf32>
    %c0_41 = arith.constant 0 : index
    %c6_42 = arith.constant 6 : index
    %c0_43 = arith.constant 0 : index
    %142 = vector.load %arg4[%c0_41, %c6_42, %c0_43] : memref<1x10x384xf32, #tpu.memory_space<vmem>>, vector<1x1x384xf32>
    %143 = vector.shape_cast %142 : vector<1x1x384xf32> to vector<1x384xf32>
    %144 = vector.shape_cast %141 : vector<1x384xf32> to vector<1x1x384xf32>
    tpu.vector_store %arg4[%c0_41, %c6_42, %c0_43], %144 {strides = array<i32>} : memref<1x10x384xf32, #tpu.memory_space<vmem>>, vector<1x1x384xf32>,
    %145 = vector.extract_strided_slice %8 {offsets = [0, 10], sizes = [8, 1], strides = [1, 1]} : vector<8x16xf32> to vector<8x1xf32>
    %146 = vector.broadcast %145 : vector<8x1xf32> to vector<8x384xf32>
    %147 = arith.mulf %146, %71 : vector<8x384xf32>
    %cst_44 = arith.constant dense<0.000000e+00> : vector<384xf32>
    %148 = vector.multi_reduction <add>, %147, %cst_44 [0] : vector<8x384xf32> to vector<384xf32>
    %149 = vector.shape_cast %148 : vector<384xf32> to vector<1x384xf32>
    %c0_45 = arith.constant 0 : index
    %c7 = arith.constant 7 : index
    %c0_46 = arith.constant 0 : index
    %150 = vector.load %arg4[%c0_45, %c7, %c0_46] : memref<1x10x384xf32, #tpu.memory_space<vmem>>, vector<1x1x384xf32>
    %151 = vector.shape_cast %150 : vector<1x1x384xf32> to vector<1x384xf32>
    %152 = vector.shape_cast %149 : vector<1x384xf32> to vector<1x1x384xf32>
    tpu.vector_store %arg4[%c0_45, %c7, %c0_46], %152 {strides = array<i32>} : memref<1x10x384xf32, #tpu.memory_space<vmem>>, vector<1x1x384xf32>,
    %153 = vector.extract_strided_slice %8 {offsets = [0, 11], sizes = [8, 1], strides = [1, 1]} : vector<8x16xf32> to vector<8x1xf32>
    %154 = vector.broadcast %153 : vector<8x1xf32> to vector<8x384xf32>
    %155 = arith.mulf %154, %71 : vector<8x384xf32>
    %cst_47 = arith.constant dense<0.000000e+00> : vector<384xf32>
    %156 = vector.multi_reduction <add>, %155, %cst_47 [0] : vector<8x384xf32> to vector<384xf32>
    %157 = vector.shape_cast %156 : vector<384xf32> to vector<1x384xf32>
    %c0_48 = arith.constant 0 : index
    %c8 = arith.constant 8 : index
    %c0_49 = arith.constant 0 : index
    %158 = vector.load %arg4[%c0_48, %c8, %c0_49] : memref<1x10x384xf32, #tpu.memory_space<vmem>>, vector<1x1x384xf32>
    %159 = vector.shape_cast %158 : vector<1x1x384xf32> to vector<1x384xf32>
    %160 = vector.shape_cast %157 : vector<1x384xf32> to vector<1x1x384xf32>
    tpu.vector_store %arg4[%c0_48, %c8, %c0_49], %160 {strides = array<i32>} : memref<1x10x384xf32, #tpu.memory_space<vmem>>, vector<1x1x384xf32>,
    %161 = vector.extract_strided_slice %8 {offsets = [0, 12], sizes = [8, 1], strides = [1, 1]} : vector<8x16xf32> to vector<8x1xf32>
    %162 = vector.broadcast %161 : vector<8x1xf32> to vector<8x384xf32>
    %163 = arith.mulf %162, %71 : vector<8x384xf32>
    %cst_50 = arith.constant dense<0.000000e+00> : vector<384xf32>
    %164 = vector.multi_reduction <add>, %163, %cst_50 [0] : vector<8x384xf32> to vector<384xf32>
    %165 = vector.shape_cast %164 : vector<384xf32> to vector<1x384xf32>
    %c0_51 = arith.constant 0 : index
    %c9 = arith.constant 9 : index
    %c0_52 = arith.constant 0 : index
    %166 = vector.load %arg4[%c0_51, %c9, %c0_52] : memref<1x10x384xf32, #tpu.memory_space<vmem>>, vector<1x1x384xf32>
    %167 = vector.shape_cast %166 : vector<1x1x384xf32> to vector<1x384xf32>
    %168 = vector.shape_cast %165 : vector<1x384xf32> to vector<1x1x384xf32>
    tpu.vector_store %arg4[%c0_51, %c9, %c0_52], %168 {strides = array<i32>} : memref<1x10x384xf32, #tpu.memory_space<vmem>>, vector<1x1x384xf32>,
    %c0_53 = arith.constant 0 : index
    %c0_54 = arith.constant 0 : index
    %c0_55 = arith.constant 0 : index
    %169 = vector.load %arg5[%c0_53, %c0_54, %c0_55] : memref<1x2x384xi32, #tpu.memory_space<vmem>>, vector<1x1x384xi32>
    %170 = vector.shape_cast %169 : vector<1x1x384xi32> to vector<1x384xi32>
    %171 = vector.shape_cast %90 : vector<1x384xi32> to vector<1x1x384xi32>
    tpu.vector_store %arg5[%c0_53, %c0_54, %c0_55], %171 {strides = array<i32>} : memref<1x2x384xi32, #tpu.memory_space<vmem>>, vector<1x1x384xi32>,
    %c0_56 = arith.constant 0 : index
    %c1_57 = arith.constant 1 : index
    %c0_58 = arith.constant 0 : index
    %172 = vector.load %arg5[%c0_56, %c1_57, %c0_58] : memref<1x2x384xi32, #tpu.memory_space<vmem>>, vector<1x1x384xi32>
    %173 = vector.shape_cast %172 : vector<1x1x384xi32> to vector<1x384xi32>
    %174 = vector.shape_cast %98 : vector<1x384xi32> to vector<1x1x384xi32>
    tpu.vector_store %arg5[%c0_56, %c1_57, %c0_58], %174 {strides = array<i32>} : memref<1x2x384xi32, #tpu.memory_space<vmem>>, vector<1x1x384xi32>,
    return
  }
  func.func @transform_0(%arg0: i32, %arg1: i32) -> (i32, i32) {
    %c0_i32 = arith.constant 0 : i32
    %c0_i32_0 = arith.constant 0 : i32
    return %c0_i32, %arg1 : i32, i32
  }
  func.func @transform_1(%arg0: i32, %arg1: i32) -> (i32, i32, i32) {
    %c0_i32 = arith.constant 0 : i32
    %c0_i32_0 = arith.constant 0 : i32
    %c0_i32_1 = arith.constant 0 : i32
    return %arg0, %c0_i32, %c0_i32_0 : i32, i32, i32
  }
  func.func @transform_2(%arg0: i32, %arg1: i32) -> (i32, i32, i32) {
    %c0_i32 = arith.constant 0 : i32
    %c0_i32_0 = arith.constant 0 : i32
    return %arg0, %c0_i32, %arg1 : i32, i32, i32
  }
  func.func @transform_3(%arg0: i32, %arg1: i32) -> (i32, i32, i32) {
    %c0_i32 = arith.constant 0 : i32
    %c0_i32_0 = arith.constant 0 : i32
    return %arg0, %c0_i32, %arg1 : i32, i32, i32
  }
}

</mosaic_0001>

<llo_original>
// kernel: tpu_custom_call.1
$region0: #{tpu_custom_call.1}
  #allocation0 [shape = 'u32[]', space=smem, size = 0x4, offset = 0x4, fixed_abs, tag = 'smem constant byte address 0x4 - core index']
  #allocation1 [shape = 'u32[72,128]{1,0:T(1,128)}', space=vmem, size = 0x9000, scoped, tag = 'internal scratch']
  %s0 = inlined_call_operand.hbm [shape: f32[8,384], index: 0, kind: input, shape index: {}]
  %s1 = inlined_call_operand.hbm [shape: f32[3,8,16], index: 1, kind: input, shape index: {}]
  %s2 = inlined_call_operand.vmem [shape: f32[3,10,384], index: 2, kind: output, shape index: {0}]
  %s3 = inlined_call_operand.hbm [shape: s32[3,2,384], index: 3, kind: output, shape index: {1}]
  %4 = xla_tuple %s2, %s3
  %s5 = sld [smem:[#allocation0]]
  $region57: #{tpu_custom_call.1} parent=0
    _
  %s7 = ssub.s32 1, %s5
  %s8 = scalar_select 0, %s7, %s5
  $region1: #{tpu_custom_call.1} parent=0
    #allocation2 [shape = 'u8[12288]{0}', space=vmem, size = 0x3000, scoped, tag = 'input window, operand 0, single buffered']
    #allocation3 [shape = 's32[2]{0}', space=sflag, size = 0x8, scoped, tag = 'scoped memory for tpu_custom_call.1']
    #allocation4 [shape = 's32[2]{0}', space=sflag, size = 0x8, scoped, tag = 'scoped memory for tpu_custom_call.1']
    #allocation5 [shape = 'u8[8192]{0}', space=vmem, size = 0x2000, scoped, tag = 'input window, operand 1']
    #allocation6 [shape = 's32[2]{0}', space=sflag, size = 0x8, scoped, tag = 'scoped memory for tpu_custom_call.1']
    #allocation7 [shape = 'u8[6144]{0}', space=vmem, size = 0x1800, scoped, tag = 'output window, operand 1']
    %9 = vsyncpa [#allocation3], 0
    %10 = vsyncpa [#allocation6], 0
    %s11 = scalar_lea.sflag [#allocation6], 1
    %12 = vsyncpa %s11, 0
    %13 = vsyncpa [#allocation4], 0
    %s14 = scalar_lea.sflag [#allocation4], 1
    %15 = vsyncpa %s14, 0
    loop: start=0, step=1, limit=5
    $region2: #{tpu_custom_call.1} parent=1 // loop_pre_header
      _
    $region3: #{tpu_custom_call.1} parent=1 // loop_header
      %s17 = sphi 0, %s21
      %p18 = scmp.ge.s32.totalorder %s17, 5
      %s24 = sphi 0, %s36
      %s25 = sphi 0, %s32
      %s26 = sphi 0, %s24
      %s27 = sphi 0, %s25
      %s28 = sphi 0, %s26
      %s29 = sphi 0, %s27
      %s39 = sphi 0, %s41
      %s42 = sphi 0, %s39
      %s43 = sphi 0, %s42
      %s59 = sphi 0, %s43
      %s65 = sphi 0, %s67
      %s68 = sphi 0, %s65
      %s69 = sphi 0, %s68
      %s85 = sphi 0, %s69
      %s93 = sphi 0, %s95
      %s96 = sphi 0, %s93
      %s97 = sphi 0, %s96
      %s113 = sphi 0, %s97
      %s121 = sphi 0, %s123
      %s124 = sphi 0, %s121
      %s125 = sphi 0, %s124
      %s141 = sphi 0, %s125
    $region4: #{tpu_custom_call.1} parent=1 // loop_header_branch
      %20 = sbr.rel (%p18) target = $region8
    $region5: #{tpu_custom_call.1} parent=1 // loop_body
      %s22 = ssub.s32 %s17, 1
      %s23 = ssub.s32 %s17, 2
      %s30 = sadd.s32 1, %s25
      %p31 = scmp.ge.s32.totalorder %s30, 1
      %s32 = scalar_select %p31, 0, %s30
      %s33 = sadd.s32 1, %s24
      %s34 = scalar_select %p31, %s33, %s24
      %p35 = scmp.ge.s32.totalorder %s34, 3
      %s36 = scalar_select %p35, 0, %s34
      %s37 = ssub.s32 %s25, %s32
      %p38 = scmp.eq.s32.totalorder %s37, 0
      %s40 = sadd.s32 %s39, 1
      %s41 = scalar_select %p38, %s39, %s40
      %p44 = pneg %p38
      %p45 = scmp.eq.s32.totalorder %s17, 2
      %p46 = por %p44, %p45
      %p47 = scmp.ne.s32.totalorder %s39, %s42
      %p48 = scmp.eq.s32.totalorder %s17, 0
      %p49 = por %p47, %p48
      %p50 = scmp.ne.s32.totalorder %s39, %s42
      %p51 = scmp.eq.s32.totalorder %s22, 2
      %p52 = por %p50, %p51
      %p53 = scmp.ne.s32.totalorder %s42, %s43
      %p54 = scmp.eq.s32.totalorder %s22, 0
      %p55 = por %p53, %p54
      %p56 = scmp.ne.s32.totalorder %s42, %s43
      %p57 = scmp.eq.s32.totalorder %s23, 2
      %p58 = por %p56, %p57
      %p60 = scmp.ne.s32.totalorder %s43, %s59
      %p61 = scmp.eq.s32.totalorder %s23, 0
      %p62 = por %p60, %p61
      %s63 = ssub.s32 %s24, %s36
      %p64 = scmp.eq.s32.totalorder %s63, 0
      %s66 = sadd.s32 %s65, 1
      %s67 = scalar_select %p64, %s65, %s66
      %p70 = pneg %p64
      %p71 = scmp.eq.s32.totalorder %s17, 2
      %p72 = por %p70, %p71
      %p73 = scmp.ne.s32.totalorder %s65, %s68
      %p74 = scmp.eq.s32.totalorder %s17, 0
      %p75 = por %p73, %p74
      %p76 = scmp.ne.s32.totalorder %s65, %s68
      %p77 = scmp.eq.s32.totalorder %s22, 2
      %p78 = por %p76, %p77
      %p79 = scmp.ne.s32.totalorder %s68, %s69
      %p80 = scmp.eq.s32.totalorder %s22, 0
      %p81 = por %p79, %p80
      %p82 = scmp.ne.s32.totalorder %s68, %s69
      %p83 = scmp.eq.s32.totalorder %s23, 2
      %p84 = por %p82, %p83
      %p86 = scmp.ne.s32.totalorder %s69, %s85
      %p87 = scmp.eq.s32.totalorder %s23, 0
      %p88 = por %p86, %p87
      %s89 = ssub.s32 %s24, %s36
      %s90 = ssub.s32 %s25, %s32
      %s91 = sor.u32 %s89, %s90
      %p92 = scmp.eq.s32.totalorder %s91, 0
      %s94 = sadd.s32 %s93, 1
      %s95 = scalar_select %p92, %s93, %s94
      %p98 = pneg %p92
      %p99 = scmp.eq.s32.totalorder %s17, 2
      %p100 = por %p98, %p99
      %p101 = scmp.ne.s32.totalorder %s93, %s96
      %p102 = scmp.eq.s32.totalorder %s17, 0
      %p103 = por %p101, %p102
      %p104 = scmp.ne.s32.totalorder %s93, %s96
      %p105 = scmp.eq.s32.totalorder %s22, 2
      %p106 = por %p104, %p105
      %p107 = scmp.ne.s32.totalorder %s96, %s97
      %p108 = scmp.eq.s32.totalorder %s22, 0
      %p109 = por %p107, %p108
      %p110 = scmp.ne.s32.totalorder %s96, %s97
      %p111 = scmp.eq.s32.totalorder %s23, 2
      %p112 = por %p110, %p111
      %p114 = scmp.ne.s32.totalorder %s97, %s113
      %p115 = scmp.eq.s32.totalorder %s23, 0
      %p116 = por %p114, %p115
      %s117 = ssub.s32 %s24, %s36
      %s118 = ssub.s32 %s25, %s32
      %s119 = sor.u32 %s117, %s118
      %p120 = scmp.eq.s32.totalorder %s119, 0
      %s122 = sadd.s32 %s121, 1
      %s123 = scalar_select %p120, %s121, %s122
      %p126 = pneg %p120
      %p127 = scmp.eq.s32.totalorder %s17, 2
      %p128 = por %p126, %p127
      %p129 = scmp.ne.s32.totalorder %s121, %s124
      %p130 = scmp.eq.s32.totalorder %s17, 0
      %p131 = por %p129, %p130
      %p132 = scmp.ne.s32.totalorder %s121, %s124
      %p133 = scmp.eq.s32.totalorder %s22, 2
      %p134 = por %p132, %p133
      %p135 = scmp.ne.s32.totalorder %s124, %s125
      %p136 = scmp.eq.s32.totalorder %s22, 0
      %p137 = por %p135, %p136
      %p138 = scmp.ne.s32.totalorder %s124, %s125
      %p139 = scmp.eq.s32.totalorder %s23, 2
      %p140 = por %p138, %p139
      %p142 = scmp.ne.s32.totalorder %s125, %s141
      %p143 = scmp.eq.s32.totalorder %s23, 0
      %p144 = por %p142, %p143
      %p145 = scmp.le.s32.totalorder 1, %s17
      %p146 = scmp.lt.s32.totalorder %s17, 4
      %p147 = pnand %p145, %p146
      %p148 = pneg %p147
      // Predicated region
      $region9: #{tpu_custom_call.1} parent=5 // pred_check
        _
      $region10: #{tpu_custom_call.1} parent=5 // pred_check_branch
        %150 = sbr.rel (%p147) target = $region12
      $region11: #{tpu_custom_call.1} parent=5 // pred_region
        %s151 = ssub.s32 %s17, 1
        // Predicated region
        $region13: #{tpu_custom_call.1} parent=11 // pred_check
          %p152 = pneg %p55
        $region14: #{tpu_custom_call.1} parent=11 // pred_check_branch
          %154 = sbr.rel (%p152) target = $region16
        $region15: #{tpu_custom_call.1} parent=11 // pred_region
          %s155 = smul.u32 3, %s27
          %157 = vsyncadd [#allocation3], 0
          %s158 = smul.addr %s155, 8
          %s159 = scalar_lea.hbm %s0, %s158
          %s161 = sshll.u32 %s159, 4
          %s162 = int_to_ptr.hbm [resolvable:$true] %s161
          %s163 = sshll.u32 [#allocation2], 4
          %s164 = int_to_ptr.vmem [resolvable:$true] %s163
          %166 = dma.hbm_to_vmem [thread:$0]  %s162, 384, %s164, [#allocation3]
        $region16: #{tpu_custom_call.1} parent=11 // pred_fallthru
          _
      $region12: #{tpu_custom_call.1} parent=5 // pred_fallthru
        _
      %p167 = scmp.lt.s32.totalorder %s17, 3
      // Predicated region
      $region17: #{tpu_custom_call.1} parent=5 // pred_check
        %p168 = pneg %p167
      $region18: #{tpu_custom_call.1} parent=5 // pred_check_branch
        %170 = sbr.rel (%p168) target = $region20
      $region19: #{tpu_custom_call.1} parent=5 // pred_region
        // Predicated region
        $region21: #{tpu_custom_call.1} parent=19 // pred_check
          %p171 = pneg %p75
        $region22: #{tpu_custom_call.1} parent=19 // pred_check_branch
          %173 = sbr.rel (%p171) target = $region24
        $region23: #{tpu_custom_call.1} parent=19 // pred_region
          %s174 = sand.u32 %s65, 1
          %s175 = scalar_lea.sflag [#allocation6], %s174
          %s176 = sand.u32 %s65, 1
          %s177 = smul.addr %s176, 8
          %s178 = scalar_lea.vmem [#allocation5], %s177
          %180 = vsyncadd %s175, 0
          %s181 = smul.addr %s24, 8
          %s182 = scalar_lea.hbm %s1, %s181
          %s184 = sshll.u32 %s182, 4
          %s185 = int_to_ptr.hbm [resolvable:$true] %s184
          %s186 = sshll.u32 %s178, 4
          %s187 = int_to_ptr.vmem [resolvable:$true] %s186
          %189 = dma.hbm_to_vmem [thread:$0]  %s185, 128, %s187, %s175
        $region24: #{tpu_custom_call.1} parent=19 // pred_fallthru
          _
      $region20: #{tpu_custom_call.1} parent=5 // pred_fallthru
        _
      %p190 = scmp.le.s32.totalorder 1, %s17
      %p191 = scmp.lt.s32.totalorder %s17, 4
      %p192 = pnand %p190, %p191
      %p193 = pneg %p192
      // Predicated region
      $region25: #{tpu_custom_call.1} parent=5 // pred_check
        _
      $region26: #{tpu_custom_call.1} parent=5 // pred_check_branch
        %195 = sbr.rel (%p192) target = $region28
      $region27: #{tpu_custom_call.1} parent=5 // pred_region
        %s196 = ssub.s32 %s17, 1
        // Predicated region
        $region29: #{tpu_custom_call.1} parent=27 // pred_check
          %p197 = pneg %p55
        $region30: #{tpu_custom_call.1} parent=27 // pred_check_branch
          %199 = sbr.rel (%p197) target = $region32
        $region31: #{tpu_custom_call.1} parent=27 // pred_region
          %201 = dma.done [#allocation3], 384
        $region32: #{tpu_custom_call.1} parent=27 // pred_fallthru
          _
        %s202 = sand.u32 %s68, 1
        %s203 = scalar_lea.sflag [#allocation6], %s202
        %s204 = sand.u32 %s68, 1
        %s205 = smul.addr %s204, 8
        %s206 = scalar_lea.vmem [#allocation5], %s205
        // Predicated region
        $region33: #{tpu_custom_call.1} parent=27 // pred_check
          %p207 = pneg %p81
        $region34: #{tpu_custom_call.1} parent=27 // pred_check_branch
          %209 = sbr.rel (%p207) target = $region36
        $region35: #{tpu_custom_call.1} parent=27 // pred_region
          %211 = dma.done %s203, 128
        $region36: #{tpu_custom_call.1} parent=27 // pred_fallthru
          _
        %p212 = pneg %p55
        %p213 = pneg %p52
        %s214 = sand.u32 %s68, 1
        %s215 = scalar_lea.sflag [#allocation6], %s214
        %s216 = sand.u32 %s68, 1
        %s217 = smul.addr %s216, 8
        %s218 = scalar_lea.vmem [#allocation5], %s217
        %p219 = pneg %p81
        %p220 = pneg %p78
        %p221 = pneg %p109
        %p222 = pneg %p106
        %s223 = smul.u32 3, %s27
        %p224 = scmp.lt.s32.totalorder %s26, 2
        %s225 = scalar_select %p224, %s26, 2
        %p226 = scmp.lt.s32.totalorder %s223, 2
        %s227 = scalar_select %p226, %s223, 2
        %s228 = smul.addr %s225, 6
        %s229 = sadd.s32 %s227, %s228
        %s230 = smul.addr %s229, 8
        %s231 = scalar_lea.vmem %s2, %s230
        %p232 = pneg %p137
        %p233 = pneg %p134
        %s234 = sand.u32 %s124, 1
        %s235 = scalar_lea.sflag [#allocation4], %s234
        %s236 = sand.u32 %s124, 1
        %s237 = smul.addr %s236, 6
        %s238 = scalar_lea.vmem [#allocation7], %s237
        %s239 = smul.u32 3, %s27
        %s240 = smul.u32 3, %s27
        %p241 = scmp.lt.s32.totalorder %s26, 2
        %s242 = scalar_select %p241, %s26, 2
        %p243 = scmp.lt.s32.totalorder %s240, 2
        %s244 = scalar_select %p243, %s240, 2
        %s245 = smul.addr %s242, 6
        %s246 = sadd.s32 %s244, %s245
        %s247 = smul.addr %s246, 8
        %s248 = scalar_lea.vmem %s2, %s247
        %s249 = smul.u32 3, %s27
        %s250 = smul.u32 3, %s27
        %v251 = vld [vmem:[#allocation2] ss:$8 sm:$0x7]
        %s252 = scalar_lea.vmem [#allocation2], 1
        %v253 = vld [vmem:[%s252] ss:$8 sm:$0x7]
        %s254 = scalar_lea.vmem [#allocation2], 2
        %v255 = vld [vmem:[%s254] ss:$8 sm:$0x7]
        %s256 = scalar_lea.vmem [#allocation2], 3
        %v257 = vld [vmem:[%s256] ss:$8 sm:$0x7]
        %s258 = scalar_lea.vmem [#allocation2], 4
        %v259 = vld [vmem:[%s258] ss:$8 sm:$0x7]
        %s260 = scalar_lea.vmem [#allocation2], 5
        %v261 = vld [vmem:[%s260] ss:$8 sm:$0x7]
        %s262 = scalar_lea.vmem [#allocation2], 6
        %v263 = vld [vmem:[%s262] ss:$8 sm:$0x7]
        %v264 = vld [vmem:[%s206] sm:$0xff]
        %v266 = vperm.slane %v251, 0
        %v267 = vperm.slane %v251, 1
        %v268 = vperm.slane %v251, 2
        %273 = vset.pattern.permute.xlu0 4
        %274 = vperm.xlu0 %273, %v264
        %v275 = vpop.permute.xlu0 %274
        %v277 = vsub.f32 %v266, %v275
        %v278 = vsub.f32 %v267, %v275
        %v279 = vsub.f32 %v268, %v275
        %v281 = vperm.slane %v253, 0
        %v282 = vperm.slane %v253, 1
        %v283 = vperm.slane %v253, 2
        %287 = vset.pattern.permute.xlu0 5
        %288 = vperm.xlu0 %287, %v264
        %v289 = vpop.permute.xlu0 %288
        %v291 = vsub.f32 %v281, %v289
        %v292 = vsub.f32 %v282, %v289
        %v293 = vsub.f32 %v283, %v289
        %294 = vset.pattern.permute.xlu0 0
        %295 = vperm.xlu0 %294, %v264
        %v296 = vpop.permute.xlu0 %295
        %v298 = vsub.f32 %v266, %v296
        %v299 = vsub.f32 %v267, %v296
        %v300 = vsub.f32 %v268, %v296
        %301 = vset.pattern.permute.xlu0 1
        %302 = vperm.xlu0 %301, %v264
        %v303 = vpop.permute.xlu0 %302
        %v305 = vsub.f32 %v281, %v303
        %v306 = vsub.f32 %v282, %v303
        %v307 = vsub.f32 %v283, %v303
        %308 = vset.pattern.permute.xlu0 2
        %309 = vperm.xlu0 %308, %v264
        %v310 = vpop.permute.xlu0 %309
        %v312 = vsub.f32 %v310, %v266
        %v313 = vsub.f32 %v310, %v267
        %v314 = vsub.f32 %v310, %v268
        %315 = vset.pattern.permute.xlu0 3
        %316 = vperm.xlu0 %315, %v264
        %v317 = vpop.permute.xlu0 %316
        %v319 = vsub.f32 %v317, %v281
        %v320 = vsub.f32 %v317, %v282
        %v321 = vsub.f32 %v317, %v283
        %v322 = vmax.f32 %v298, %v305
        %v323 = vmax.f32 %v299, %v306
        %v324 = vmax.f32 %v300, %v307
        %v325 = vmax.f32 %v312, %v319
        %v326 = vmax.f32 %v313, %v320
        %v327 = vmax.f32 %v314, %v321
        %v328 = vmax.f32 %v322, %v325
        %v329 = vmax.f32 %v323, %v326
        %v330 = vmax.f32 %v324, %v327
        %v331 = vand.u32 2147483647, %v277
        %v332 = vand.u32 2147483647, %v278
        %v333 = vand.u32 2147483647, %v279
        %v334 = vand.u32 2147483647, %v291
        %v335 = vand.u32 2147483647, %v292
        %v336 = vand.u32 2147483647, %v293
        %v337 = vmax.f32 %v331, %v334
        %v338 = vmax.f32 %v332, %v335
        %v339 = vmax.f32 %v333, %v336
        %v341 = vperm.slane %v259, 0
        %v342 = vperm.slane %v259, 1
        %v343 = vperm.slane %v259, 2
        %v347 = vsub.f32 %v341, %v337
        %v348 = vsub.f32 %v342, %v338
        %v349 = vsub.f32 %v343, %v339
        %vm350 = vcmp.gt.f32.partialorder %v347, 0.0
        %vm351 = vcmp.gt.f32.partialorder %v348, 0.0
        %vm352 = vcmp.gt.f32.partialorder %v349, 0.0
        %v354 = vperm.slane %v255, 0
        %v355 = vperm.slane %v255, 1
        %v356 = vperm.slane %v255, 2
        %vm360 = vcmp.ge.f32.partialorder %v328, %v354
        %vm361 = vcmp.ge.f32.partialorder %v329, %v355
        %vm362 = vcmp.ge.f32.partialorder %v330, %v356
        %v364 = vperm.slane %v257, 0
        %v365 = vperm.slane %v257, 1
        %v366 = vperm.slane %v257, 2
        %vm370 = vcmp.le.f32.partialorder %v328, %v364
        %vm371 = vcmp.le.f32.partialorder %v329, %v365
        %vm372 = vcmp.le.f32.partialorder %v330, %v366
        %vm373 = vmand %vm360, %vm370
        %vm374 = vmand %vm361, %vm371
        %vm375 = vmand %vm362, %vm372
        %vm376 = vmand %vm350, %vm373
        %vm377 = vmand %vm351, %vm374
        %vm378 = vmand %vm352, %vm375
        %vm379 = vcmp.gt.f32.partialorder %v264, 0.5
        %v380 = vsel %vm379, 1, 0
        %381 = vset.pattern.permute.xlu0 15
        %382 = vperm.xlu0 %381, %v380
        %v383 = vpop.permute.xlu0 %382
        %vm384 = vcmp.eq.s32.totalorder %v383, 1
        %vm385 = vmand %vm376, %vm384
        %vm386 = vmand %vm377, %vm384
        %vm387 = vmand %vm378, %vm384
        %v388 = vmul.f32 %v277, %v277
        %v389 = vmul.f32 %v278, %v278
        %v390 = vmul.f32 %v279, %v279
        %v391 = vmul.f32 %v291, %v291
        %v392 = vmul.f32 %v292, %v292
        %v393 = vmul.f32 %v293, %v293
        %v394 = vadd.f32 %v388, %v391
        %v395 = vadd.f32 %v389, %v392
        %v396 = vadd.f32 %v390, %v393
        %v397 = vsel %vm385, %v394, 1e+08
        %v398 = vsel %vm386, %v395, 1e+08
        %v399 = vsel %vm387, %v396, 1e+08
        %v400 = vrot.slane %v397, 4
        %v401 = vmin.f32 %v397, %v400
        %v402 = vrot.slane %v401, 2
        %v403 = vmin.f32 %v401, %v402
        %v404 = vrot.slane %v403, 1
        %v405 = vmin.f32 %v403, %v404
        %v406 = vrot.slane %v398, 4
        %v407 = vmin.f32 %v398, %v406
        %v408 = vrot.slane %v407, 2
        %v409 = vmin.f32 %v407, %v408
        %v410 = vrot.slane %v409, 1
        %v411 = vmin.f32 %v409, %v410
        %v412 = vrot.slane %v399, 4
        %v413 = vmin.f32 %v399, %v412
        %v414 = vrot.slane %v413, 2
        %v415 = vmin.f32 %v413, %v414
        %v416 = vrot.slane %v415, 1
        %v417 = vmin.f32 %v415, %v416
        %v418 = vlaneseq
        %v419 = vshrl.u32 %v418, 7
        %vm420 = vcmp.eq.f32.partialorder %v397, %v405
        %vm421 = vcmp.eq.f32.partialorder %v398, %v411
        %vm422 = vcmp.eq.f32.partialorder %v399, %v417
        %v423 = vsel %vm420, %v419, 8
        %v424 = vsel %vm421, %v419, 8
        %v425 = vsel %vm422, %v419, 8
        %v426 = vrot.slane %v423, 4
        %vm427 = vcmp.lt.s32.totalorder %v423, %v426
        %v428 = vsel %vm427, %v423, %v426
        %v429 = vrot.slane %v428, 2
        %vm430 = vcmp.lt.s32.totalorder %v428, %v429
        %v431 = vsel %vm430, %v428, %v429
        %v432 = vrot.slane %v431, 1
        %vm433 = vcmp.lt.s32.totalorder %v431, %v432
        %v434 = vsel %vm433, %v431, %v432
        %v435 = vrot.slane %v424, 4
        %vm436 = vcmp.lt.s32.totalorder %v424, %v435
        %v437 = vsel %vm436, %v424, %v435
        %v438 = vrot.slane %v437, 2
        %vm439 = vcmp.lt.s32.totalorder %v437, %v438
        %v440 = vsel %vm439, %v437, %v438
        %v441 = vrot.slane %v440, 1
        %vm442 = vcmp.lt.s32.totalorder %v440, %v441
        %v443 = vsel %vm442, %v440, %v441
        %v444 = vrot.slane %v425, 4
        %vm445 = vcmp.lt.s32.totalorder %v425, %v444
        %v446 = vsel %vm445, %v425, %v444
        %v447 = vrot.slane %v446, 2
        %vm448 = vcmp.lt.s32.totalorder %v446, %v447
        %v449 = vsel %vm448, %v446, %v447
        %v450 = vrot.slane %v449, 1
        %vm451 = vcmp.lt.s32.totalorder %v449, %v450
        %v452 = vsel %vm451, %v449, %v450
        %vm453 = vcmp.eq.s32.totalorder %v419, %v434
        %vm454 = vcmp.eq.s32.totalorder %v419, %v443
        %vm455 = vcmp.eq.s32.totalorder %v419, %v452
        %v456 = vsel %vm453, 1, 0
        %v457 = vsel %vm454, 1, 0
        %v458 = vsel %vm455, 1, 0
        %v459 = vcvt.s32.f32 %v456
        %v460 = vcvt.s32.f32 %v457
        %v461 = vcvt.s32.f32 %v458
        %v462 = vmul.f32 %v277, %v459
        %v463 = vmul.f32 %v278, %v460
        %v464 = vmul.f32 %v279, %v461
        %v465 = vrot.slane %v462, 4
        %v466 = vadd.f32 %v462, %v465
        %v467 = vrot.slane %v466, 2
        %v468 = vadd.f32 %v466, %v467
        %v469 = vrot.slane %v468, 1
        %v470 = vadd.f32 %v468, %v469
        %v471 = vrot.slane %v463, 4
        %v472 = vadd.f32 %v463, %v471
        %v473 = vrot.slane %v472, 2
        %v474 = vadd.f32 %v472, %v473
        %v475 = vrot.slane %v474, 1
        %v476 = vadd.f32 %v474, %v475
        %v477 = vrot.slane %v464, 4
        %v478 = vadd.f32 %v464, %v477
        %v479 = vrot.slane %v478, 2
        %v480 = vadd.f32 %v478, %v479
        %v481 = vrot.slane %v480, 1
        %v482 = vadd.f32 %v480, %v481
        %v483 = vmul.f32 %v291, %v459
        %v484 = vmul.f32 %v292, %v460
        %v485 = vmul.f32 %v293, %v461
        %v486 = vrot.slane %v483, 4
        %v487 = vadd.f32 %v483, %v486
        %v488 = vrot.slane %v487, 2
        %v489 = vadd.f32 %v487, %v488
        %v490 = vrot.slane %v489, 1
        %v491 = vadd.f32 %v489, %v490
        %v492 = vrot.slane %v484, 4
        %v493 = vadd.f32 %v484, %v492
        %v494 = vrot.slane %v493, 2
        %v495 = vadd.f32 %v493, %v494
        %v496 = vrot.slane %v495, 1
        %v497 = vadd.f32 %v495, %v496
        %v498 = vrot.slane %v485, 4
        %v499 = vadd.f32 %v485, %v498
        %v500 = vrot.slane %v499, 2
        %v501 = vadd.f32 %v499, %v500
        %v502 = vrot.slane %v501, 1
        %v503 = vadd.f32 %v501, %v502
        %v504 = vmul.f32 %v470, %v470
        %v505 = vmul.f32 %v476, %v476
        %v506 = vmul.f32 %v482, %v482
        %v507 = vmul.f32 %v491, %v491
        %v508 = vmul.f32 %v497, %v497
        %v509 = vmul.f32 %v503, %v503
        %v510 = vadd.f32 %v504, %v507
        %v511 = vadd.f32 %v505, %v508
        %v512 = vadd.f32 %v506, %v509
        %vm513 = vcmp.eq.f32.partialorder %v405, 1e+08
        %vm514 = vcmp.eq.f32.partialorder %v411, 1e+08
        %vm515 = vcmp.eq.f32.partialorder %v417, 1e+08
        %516 = vset.pattern.permute.xlu0 13
        %517 = vperm.xlu0 %516, %v264
        %v518 = vpop.permute.xlu0 %517
        %v520 = vmul.f32 %v518, %v459
        %v521 = vmul.f32 %v518, %v460
        %v522 = vmul.f32 %v518, %v461
        %v523 = vrot.slane %v520, 4
        %v524 = vadd.f32 %v520, %v523
        %v525 = vrot.slane %v524, 2
        %v526 = vadd.f32 %v524, %v525
        %v527 = vrot.slane %v526, 1
        %v528 = vadd.f32 %v526, %v527
        %v529 = vrot.slane %v521, 4
        %v530 = vadd.f32 %v521, %v529
        %v531 = vrot.slane %v530, 2
        %v532 = vadd.f32 %v530, %v531
        %v533 = vrot.slane %v532, 1
        %v534 = vadd.f32 %v532, %v533
        %v535 = vrot.slane %v522, 4
        %v536 = vadd.f32 %v522, %v535
        %v537 = vrot.slane %v536, 2
        %v538 = vadd.f32 %v536, %v537
        %v539 = vrot.slane %v538, 1
        %v540 = vadd.f32 %v538, %v539
        %v541 = vcvt.f32.s32.to.zero.pseudo %v528
        %v542 = vcvt.f32.s32.to.zero.pseudo %v534
        %v543 = vcvt.f32.s32.to.zero.pseudo %v540
        %v544 = vsel %vm513, 10, %v541
        %v545 = vsel %vm514, 10, %v542
        %v546 = vsel %vm515, 10, %v543
        %547 = vset.pattern.permute.xlu0 14
        %548 = vperm.xlu0 %547, %v264
        %v549 = vpop.permute.xlu0 %548
        %v551 = vmul.f32 %v549, %v459
        %v552 = vmul.f32 %v549, %v460
        %v553 = vmul.f32 %v549, %v461
        %v554 = vrot.slane %v551, 4
        %v555 = vadd.f32 %v551, %v554
        %v556 = vrot.slane %v555, 2
        %v557 = vadd.f32 %v555, %v556
        %v558 = vrot.slane %v557, 1
        %v559 = vadd.f32 %v557, %v558
        %v560 = vrot.slane %v552, 4
        %v561 = vadd.f32 %v552, %v560
        %v562 = vrot.slane %v561, 2
        %v563 = vadd.f32 %v561, %v562
        %v564 = vrot.slane %v563, 1
        %v565 = vadd.f32 %v563, %v564
        %v566 = vrot.slane %v553, 4
        %v567 = vadd.f32 %v553, %v566
        %v568 = vrot.slane %v567, 2
        %v569 = vadd.f32 %v567, %v568
        %v570 = vrot.slane %v569, 1
        %v571 = vadd.f32 %v569, %v570
        %v572 = vcvt.f32.s32.to.zero.pseudo %v559
        %v573 = vcvt.f32.s32.to.zero.pseudo %v565
        %v574 = vcvt.f32.s32.to.zero.pseudo %v571
        %v575 = vsel %vm513, 9, %v572
        %v576 = vsel %vm514, 9, %v573
        %v577 = vsel %vm515, 9, %v574
        %v578 = vrsqrt.pop %v510
        %v579 = vmul.f32 %v578, %v510
        %v580 = vmul.f32 %v579, %v578
        %v581 = vmul.f32 0.5, %v580
        %v582 = vsub.f32 1.5, %v581
        %v583 = vmul.f32 %v578, %v582
        %v584 = vmul.f32 %v510, %v583
        %vm585 = vcmp.eq.f32.partialorder %v510, inf
        %v586 = vsel %vm585, %v510, %v584
        %vm587 = vcmp.eq.f32.partialorder %v510, 0.0
        %v588 = vand.u32 %v510, 2147483648
        %v589 = vsel %vm587, %v588, %v586
        %v590 = vrsqrt.pop %v511
        %v591 = vmul.f32 %v590, %v511
        %v592 = vmul.f32 %v591, %v590
        %v593 = vmul.f32 0.5, %v592
        %v594 = vsub.f32 1.5, %v593
        %v595 = vmul.f32 %v590, %v594
        %v596 = vmul.f32 %v511, %v595
        %vm597 = vcmp.eq.f32.partialorder %v511, inf
        %v598 = vsel %vm597, %v511, %v596
        %vm599 = vcmp.eq.f32.partialorder %v511, 0.0
        %v600 = vand.u32 %v511, 2147483648
        %v601 = vsel %vm599, %v600, %v598
        %v602 = vrsqrt.pop %v512
        %v603 = vmul.f32 %v602, %v512
        %v604 = vmul.f32 %v603, %v602
        %v605 = vmul.f32 0.5, %v604
        %v606 = vsub.f32 1.5, %v605
        %v607 = vmul.f32 %v602, %v606
        %v608 = vmul.f32 %v512, %v607
        %vm609 = vcmp.eq.f32.partialorder %v512, inf
        %v610 = vsel %vm609, %v512, %v608
        %vm611 = vcmp.eq.f32.partialorder %v512, 0.0
        %v612 = vand.u32 %v512, 2147483648
        %v613 = vsel %vm611, %v612, %v610
        %v615 = vperm.slane %v261, 0
        %v616 = vperm.slane %v261, 1
        %v617 = vperm.slane %v261, 2
        %v621 = vmul.f32 %v589, %v615
        %v622 = vmul.f32 %v601, %v616
        %v623 = vmul.f32 %v613, %v617
        %v624 = vmul.f32 %v621, 1.442695
        %v625 = vpow.pop %v624
        %v626 = vmul.f32 %v622, 1.442695
        %v627 = vpow.pop %v626
        %v628 = vmul.f32 %v623, 1.442695
        %v629 = vpow.pop %v628
        %v633 = vrot.slane %v627, 7
        %v634 = vrot.slane %v629, 6
        %vm635 = vcmask 1040384
        %v636 = vsel %vm635, %v625, %v633
        %vm637 = vcmask 1041408
        %v638 = vsel %vm637, %v636, %v634
        %v640 = vlaneseq
        %vm641 = vcmp.ge.s32.totalorder %v640, 0
        %vm642 = vcmp.lt.s32.totalorder %v640, 384
        %vm643 = vmand %vm641, %vm642
        %644 = vst.msk [vmem:[%s248] ss:$8 sm:$0x7] %vm643, %v638
        %645 = vst.msk [vmem:[%s248] ss:$8 sm:$0x0] %vm643, %v638
        %v647 = vperm.slane %v263, 0
        %v648 = vperm.slane %v263, 1
        %v649 = vperm.slane %v263, 2
        %v653 = vmul.f32 %v470, %v647
        %v654 = vmul.f32 %v476, %v648
        %v655 = vmul.f32 %v482, %v649
        %v659 = vrot.slane %v654, 7
        %v660 = vrot.slane %v655, 6
        %v661 = vsel %vm635, %v653, %v659
        %v662 = vsel %vm637, %v661, %v660
        %s664 = scalar_lea.vmem %s248, 1
        %665 = vst.msk [vmem:[%s664] ss:$8 sm:$0x7] %vm643, %v662
        %666 = vst.msk [vmem:[%s664] ss:$8 sm:$0x0] %vm643, %v662
        %v667 = vmul.f32 %v491, %v647
        %v668 = vmul.f32 %v497, %v648
        %v669 = vmul.f32 %v503, %v649
        %v673 = vrot.slane %v668, 7
        %v674 = vrot.slane %v669, 6
        %v675 = vsel %vm635, %v667, %v673
        %v676 = vsel %vm637, %v675, %v674
        %s678 = scalar_lea.vmem %s248, 2
        %679 = vst.msk [vmem:[%s678] ss:$8 sm:$0x7] %vm643, %v676
        %680 = vst.msk [vmem:[%s678] ss:$8 sm:$0x0] %vm643, %v676
        %681 = vset.pattern.permute.xlu0 6
        %682 = vperm.xlu0 %681, %v264
        %v683 = vpop.permute.xlu0 %682
        %v685 = vmul.f32 %v683, %v459
        %v686 = vmul.f32 %v683, %v460
        %v687 = vmul.f32 %v683, %v461
        %v688 = vrot.slane %v685, 4
        %v689 = vadd.f32 %v685, %v688
        %v690 = vrot.slane %v689, 2
        %v691 = vadd.f32 %v689, %v690
        %v692 = vrot.slane %v691, 1
        %v693 = vadd.f32 %v691, %v692
        %v694 = vrot.slane %v686, 4
        %v695 = vadd.f32 %v686, %v694
        %v696 = vrot.slane %v695, 2
        %v697 = vadd.f32 %v695, %v696
        %v698 = vrot.slane %v697, 1
        %v699 = vadd.f32 %v697, %v698
        %v700 = vrot.slane %v687, 4
        %v701 = vadd.f32 %v687, %v700
        %v702 = vrot.slane %v701, 2
        %v703 = vadd.f32 %v701, %v702
        %v704 = vrot.slane %v703, 1
        %v705 = vadd.f32 %v703, %v704
        %v709 = vrot.slane %v699, 7
        %v710 = vrot.slane %v705, 6
        %v711 = vsel %vm635, %v693, %v709
        %v712 = vsel %vm637, %v711, %v710
        %s714 = scalar_lea.vmem %s248, 3
        %715 = vst.msk [vmem:[%s714] ss:$8 sm:$0x7] %vm643, %v712
        %716 = vst.msk [vmem:[%s714] ss:$8 sm:$0x0] %vm643, %v712
        %717 = vset.pattern.permute.xlu0 7
        %718 = vperm.xlu0 %717, %v264
        %v719 = vpop.permute.xlu0 %718
        %v721 = vmul.f32 %v719, %v459
        %v722 = vmul.f32 %v719, %v460
        %v723 = vmul.f32 %v719, %v461
        %v724 = vrot.slane %v721, 4
        %v725 = vadd.f32 %v721, %v724
        %v726 = vrot.slane %v725, 2
        %v727 = vadd.f32 %v725, %v726
        %v728 = vrot.slane %v727, 1
        %v729 = vadd.f32 %v727, %v728
        %v730 = vrot.slane %v722, 4
        %v731 = vadd.f32 %v722, %v730
        %v732 = vrot.slane %v731, 2
        %v733 = vadd.f32 %v731, %v732
        %v734 = vrot.slane %v733, 1
        %v735 = vadd.f32 %v733, %v734
        %v736 = vrot.slane %v723, 4
        %v737 = vadd.f32 %v723, %v736
        %v738 = vrot.slane %v737, 2
        %v739 = vadd.f32 %v737, %v738
        %v740 = vrot.slane %v739, 1
        %v741 = vadd.f32 %v739, %v740
        %v745 = vrot.slane %v735, 7
        %v746 = vrot.slane %v741, 6
        %v747 = vsel %vm635, %v729, %v745
        %v748 = vsel %vm637, %v747, %v746
        %s750 = scalar_lea.vmem %s248, 4
        %751 = vst.msk [vmem:[%s750] ss:$8 sm:$0x7] %vm643, %v748
        %752 = vst.msk [vmem:[%s750] ss:$8 sm:$0x0] %vm643, %v748
        %753 = vset.pattern.permute.xlu0 8
        %754 = vperm.xlu0 %753, %v264
        %v755 = vpop.permute.xlu0 %754
        %v757 = vmul.f32 %v755, %v459
        %v758 = vmul.f32 %v755, %v460
        %v759 = vmul.f32 %v755, %v461
        %v760 = vrot.slane %v757, 4
        %v761 = vadd.f32 %v757, %v760
        %v762 = vrot.slane %v761, 2
        %v763 = vadd.f32 %v761, %v762
        %v764 = vrot.slane %v763, 1
        %v765 = vadd.f32 %v763, %v764
        %v766 = vrot.slane %v758, 4
        %v767 = vadd.f32 %v758, %v766
        %v768 = vrot.slane %v767, 2
        %v769 = vadd.f32 %v767, %v768
        %v770 = vrot.slane %v769, 1
        %v771 = vadd.f32 %v769, %v770
        %v772 = vrot.slane %v759, 4
        %v773 = vadd.f32 %v759, %v772
        %v774 = vrot.slane %v773, 2
        %v775 = vadd.f32 %v773, %v774
        %v776 = vrot.slane %v775, 1
        %v777 = vadd.f32 %v775, %v776
        %v781 = vrot.slane %v771, 7
        %v782 = vrot.slane %v777, 6
        %v783 = vsel %vm635, %v765, %v781
        %v784 = vsel %vm637, %v783, %v782
        %s786 = scalar_lea.vmem %s248, 5
        %787 = vst.msk [vmem:[%s786] ss:$8 sm:$0x7] %vm643, %v784
        %788 = vst.msk [vmem:[%s786] ss:$8 sm:$0x0] %vm643, %v784
        %789 = vset.pattern.permute.xlu0 9
        %790 = vperm.xlu0 %789, %v264
        %v791 = vpop.permute.xlu0 %790
        %v793 = vmul.f32 %v791, %v459
        %v794 = vmul.f32 %v791, %v460
        %v795 = vmul.f32 %v791, %v461
        %v796 = vrot.slane %v793, 4
        %v797 = vadd.f32 %v793, %v796
        %v798 = vrot.slane %v797, 2
        %v799 = vadd.f32 %v797, %v798
        %v800 = vrot.slane %v799, 1
        %v801 = vadd.f32 %v799, %v800
        %v802 = vrot.slane %v794, 4
        %v803 = vadd.f32 %v794, %v802
        %v804 = vrot.slane %v803, 2
        %v805 = vadd.f32 %v803, %v804
        %v806 = vrot.slane %v805, 1
        %v807 = vadd.f32 %v805, %v806
        %v808 = vrot.slane %v795, 4
        %v809 = vadd.f32 %v795, %v808
        %v810 = vrot.slane %v809, 2
        %v811 = vadd.f32 %v809, %v810
        %v812 = vrot.slane %v811, 1
        %v813 = vadd.f32 %v811, %v812
        %v817 = vrot.slane %v807, 7
        %v818 = vrot.slane %v813, 6
        %v819 = vsel %vm635, %v801, %v817
        %v820 = vsel %vm637, %v819, %v818
        %s822 = scalar_lea.vmem %s248, 6
        %823 = vst.msk [vmem:[%s822] ss:$8 sm:$0x7] %vm643, %v820
        %824 = vst.msk [vmem:[%s822] ss:$8 sm:$0x0] %vm643, %v820
        %825 = vset.pattern.permute.xlu0 10
        %826 = vperm.xlu0 %825, %v264
        %v827 = vpop.permute.xlu0 %826
        %v829 = vmul.f32 %v827, %v459
        %v830 = vmul.f32 %v827, %v460
        %v831 = vmul.f32 %v827, %v461
        %v832 = vrot.slane %v829, 4
        %v833 = vadd.f32 %v829, %v832
        %v834 = vrot.slane %v833, 2
        %v835 = vadd.f32 %v833, %v834
        %v836 = vrot.slane %v835, 1
        %v837 = vadd.f32 %v835, %v836
        %v838 = vrot.slane %v830, 4
        %v839 = vadd.f32 %v830, %v838
        %v840 = vrot.slane %v839, 2
        %v841 = vadd.f32 %v839, %v840
        %v842 = vrot.slane %v841, 1
        %v843 = vadd.f32 %v841, %v842
        %v844 = vrot.slane %v831, 4
        %v845 = vadd.f32 %v831, %v844
        %v846 = vrot.slane %v845, 2
        %v847 = vadd.f32 %v845, %v846
        %v848 = vrot.slane %v847, 1
        %v849 = vadd.f32 %v847, %v848
        %v853 = vrot.slane %v843, 7
        %v854 = vrot.slane %v849, 6
        %v855 = vsel %vm635, %v837, %v853
        %v856 = vsel %vm637, %v855, %v854
        %s858 = scalar_lea.vmem %s248, 7
        %859 = vst.msk [vmem:[%s858] ss:$8 sm:$0x7] %vm643, %v856
        %860 = vst.msk [vmem:[%s858] ss:$8 sm:$0x0] %vm643, %v856
        %861 = vset.pattern.permute.xlu0 11
        %862 = vperm.xlu0 %861, %v264
        %v863 = vpop.permute.xlu0 %862
        %v865 = vmul.f32 %v863, %v459
        %v866 = vmul.f32 %v863, %v460
        %v867 = vmul.f32 %v863, %v461
        %v868 = vrot.slane %v865, 4
        %v869 = vadd.f32 %v865, %v868
        %v870 = vrot.slane %v869, 2
        %v871 = vadd.f32 %v869, %v870
        %v872 = vrot.slane %v871, 1
        %v873 = vadd.f32 %v871, %v872
        %v874 = vrot.slane %v866, 4
        %v875 = vadd.f32 %v866, %v874
        %v876 = vrot.slane %v875, 2
        %v877 = vadd.f32 %v875, %v876
        %v878 = vrot.slane %v877, 1
        %v879 = vadd.f32 %v877, %v878
        %v880 = vrot.slane %v867, 4
        %v881 = vadd.f32 %v867, %v880
        %v882 = vrot.slane %v881, 2
        %v883 = vadd.f32 %v881, %v882
        %v884 = vrot.slane %v883, 1
        %v885 = vadd.f32 %v883, %v884
        %v889 = vrot.slane %v879, 7
        %v890 = vrot.slane %v885, 6
        %v891 = vsel %vm635, %v873, %v889
        %v892 = vsel %vm637, %v891, %v890
        %s894 = scalar_lea.vmem %s248, 24
        %895 = vst.msk [vmem:[%s894] ss:$8 sm:$0x7] %vm643, %v892
        %896 = vst.msk [vmem:[%s894] ss:$8 sm:$0x0] %vm643, %v892
        %897 = vset.pattern.permute.xlu0 12
        %898 = vperm.xlu0 %897, %v264
        %v899 = vpop.permute.xlu0 %898
        %v901 = vmul.f32 %v899, %v459
        %v902 = vmul.f32 %v899, %v460
        %v903 = vmul.f32 %v899, %v461
        %v904 = vrot.slane %v901, 4
        %v905 = vadd.f32 %v901, %v904
        %v906 = vrot.slane %v905, 2
        %v907 = vadd.f32 %v905, %v906
        %v908 = vrot.slane %v907, 1
        %v909 = vadd.f32 %v907, %v908
        %v910 = vrot.slane %v902, 4
        %v911 = vadd.f32 %v902, %v910
        %v912 = vrot.slane %v911, 2
        %v913 = vadd.f32 %v911, %v912
        %v914 = vrot.slane %v913, 1
        %v915 = vadd.f32 %v913, %v914
        %v916 = vrot.slane %v903, 4
        %v917 = vadd.f32 %v903, %v916
        %v918 = vrot.slane %v917, 2
        %v919 = vadd.f32 %v917, %v918
        %v920 = vrot.slane %v919, 1
        %v921 = vadd.f32 %v919, %v920
        %v925 = vrot.slane %v915, 7
        %v926 = vrot.slane %v921, 6
        %v927 = vsel %vm635, %v909, %v925
        %v928 = vsel %vm637, %v927, %v926
        %s930 = scalar_lea.vmem %s248, 25
        %931 = vst.msk [vmem:[%s930] ss:$8 sm:$0x7] %vm643, %v928
        %932 = vst.msk [vmem:[%s930] ss:$8 sm:$0x0] %vm643, %v928
        %v933 = vrot.slane %v545, 7
        %v934 = vrot.slane %v546, 6
        %v935 = vsel %vm635, %v544, %v933
        %v936 = vsel %vm637, %v935, %v934
        %937 = vst.msk [vmem:[%s238] ss:$2 sm:$0x7] %vm643, %v936
        %v938 = vrot.slane %v576, 7
        %v939 = vrot.slane %v577, 6
        %v940 = vsel %vm635, %v575, %v938
        %v941 = vsel %vm637, %v940, %v939
        %s942 = scalar_lea.vmem %s238, 1 [#allocation7]
        %943 = vst.msk [vmem:[%s942] ss:$2 sm:$0x7] %vm643, %v941
        %s944 = smul.u32 3, %s27
        %p945 = scmp.lt.s32.totalorder %s26, 2
        %s946 = scalar_select %p945, %s26, 2
        %p947 = scmp.lt.s32.totalorder %s944, 2
        %s948 = scalar_select %p947, %s944, 2
        %s949 = smul.addr %s946, 6
        %s950 = sadd.s32 %s948, %s949
        %s951 = smul.addr %s950, 8
        %s952 = scalar_lea.vmem %s2, %s951
        %s953 = sand.u32 %s124, 1
        %s954 = scalar_lea.sflag [#allocation4], %s953
        %s955 = sand.u32 %s124, 1
        %s956 = smul.addr %s955, 6
        %s957 = scalar_lea.vmem [#allocation7], %s956
        // Predicated region
        $region37: #{tpu_custom_call.1} parent=27 // pred_check
          %p958 = pneg %p106
        $region38: #{tpu_custom_call.1} parent=27 // pred_check_branch
          %960 = sbr.rel (%p958) target = $region40
        $region39: #{tpu_custom_call.1} parent=27 // pred_region
          %s961 = smul.u32 3, %s27
        $region40: #{tpu_custom_call.1} parent=27 // pred_fallthru
          _
        // Predicated region
        $region41: #{tpu_custom_call.1} parent=27 // pred_check
          %p962 = pneg %p134
        $region42: #{tpu_custom_call.1} parent=27 // pred_check_branch
          %964 = sbr.rel (%p962) target = $region44
        $region43: #{tpu_custom_call.1} parent=27 // pred_region
          %s965 = smul.u32 3, %s27
          %967 = vsyncadd %s954, 0
          %s968 = smul.addr %s26, 3
          %s969 = sadd.s32 %s965, %s968
          %s970 = smul.addr %s969, 2
          %s971 = scalar_lea.hbm %s3, %s970
          %s973 = sshll.u32 %s957, 4
          %s974 = int_to_ptr.vmem [resolvable:$true] %s973
          %s975 = sshll.u32 %s971, 4
          %s976 = int_to_ptr.hbm [resolvable:$true] %s975
          %978 = dma.vmem_to_hbm [thread:$0]  %s974, 96, %s976, %s954
        $region44: #{tpu_custom_call.1} parent=27 // pred_fallthru
          _
      $region28: #{tpu_custom_call.1} parent=5 // pred_fallthru
        _
      %p979 = scmp.le.s32.totalorder 2, %s17
      // Predicated region
      $region45: #{tpu_custom_call.1} parent=5 // pred_check
        %p980 = pneg %p979
      $region46: #{tpu_custom_call.1} parent=5 // pred_check_branch
        %982 = sbr.rel (%p980) target = $region48
      $region47: #{tpu_custom_call.1} parent=5 // pred_region
        %s983 = ssub.s32 %s17, 2
        // Predicated region
        $region49: #{tpu_custom_call.1} parent=47 // pred_check
          %p984 = pneg %p112
        $region50: #{tpu_custom_call.1} parent=47 // pred_check_branch
          %986 = sbr.rel (%p984) target = $region52
        $region51: #{tpu_custom_call.1} parent=47 // pred_region
          %s987 = smul.u32 3, %s29
          %p988 = scmp.lt.s32.totalorder %s28, 2
          %s989 = scalar_select %p988, %s28, 2
          %p990 = scmp.lt.s32.totalorder %s987, 2
          %s991 = scalar_select %p990, %s987, 2
          %s992 = smul.addr %s989, 6
          %s993 = sadd.s32 %s991, %s992
          %s994 = smul.addr %s993, 8
          %s995 = scalar_lea.vmem %s2, %s994
        $region52: #{tpu_custom_call.1} parent=47 // pred_fallthru
          _
        // Predicated region
        $region53: #{tpu_custom_call.1} parent=47 // pred_check
          %p996 = pneg %p140
        $region54: #{tpu_custom_call.1} parent=47 // pred_check_branch
          %998 = sbr.rel (%p996) target = $region56
        $region55: #{tpu_custom_call.1} parent=47 // pred_region
          %s999 = sand.u32 %s125, 1
          %s1000 = scalar_lea.sflag [#allocation4], %s999
          %s1001 = sand.u32 %s125, 1
          %s1002 = smul.addr %s1001, 6
          %s1003 = scalar_lea.vmem [#allocation7], %s1002
          %1005 = dma.done %s1000, 96
        $region56: #{tpu_custom_call.1} parent=47 // pred_fallthru
          _
      $region48: #{tpu_custom_call.1} parent=5 // pred_fallthru
        _
    $region6: #{tpu_custom_call.1} parent=1 // loop_footer
      %s21 = sadd.s32 1, %s17
    $region7: #{tpu_custom_call.1} parent=1 // loop_footer_branch
      %16 = sbr.rel target = $region3
    $region8: #{tpu_custom_call.1} parent=1 // loop_exit
      _
    %1006 = vsyncpa [#allocation3], 1
    %s1007 = scalar_lea.sflag [#allocation3], 1
    %1008 = vsyncpa %s1007, 1
    %1009 = vsyncpa [#allocation6], 1
    %s1010 = scalar_lea.sflag [#allocation6], 1
    %1011 = vsyncpa %s1010, 1
    %1012 = vsyncpa [#allocation4], 1
    %s1013 = scalar_lea.sflag [#allocation4], 1
    %1014 = vsyncpa %s1013, 1

</llo_original>
